<compile_context>
chip_gen: v6e
topology: v6e:2x2x1
jax: 0.10.0
libtpu: 0.0.40
codegen_flags: <defaults>
</compile_context>

<pallas_src>
import jax
import jax.numpy as jnp
from jax.experimental import pallas as pl
from jax.experimental.pallas import tpu as pltpu


def sla_kernel(enc_ref, mask_ref, w_ref, b_ref, out_ref):
    # enc_ref:  (Bb, T, D)  encoding block, native dtype (bf16/fp32)
    # mask_ref: (Bb, 1, T)  float32, >0.5 means "masked"
    # w_ref:    (1, D)      linear weight (shared, VMEM, fp32)
    # b_ref:    (1,)        linear bias   (SMEM scalar, fp32)
    # out_ref:  (Bb, D)     fused representation (fp32)
    enc = enc_ref[...]                                         # native dtype
    Bb, _, D = enc.shape
    w = w_ref[...].astype(enc.dtype)                           # (1, D)
    bias = b_ref[0]

    # Linear(D -> 1) as a batched matmul on the MXU; logits are lane-dense
    # along T:  (Bb, 1, D) x (Bb, T, D) -> (Bb, 1, T), fp32 accumulation.
    # (Note: M=1 uses a sliver of the MXU; if bundle dumps on v7x show the
    #  fill/push cadence binding, this reduction could move to VPU+XLU.)
    w_b = jnp.broadcast_to(w[None, :, :], (Bb, 1, D))
    logits = jnp.einsum("bqd,btd->bqt", w_b, enc,
                        preferred_element_type=jnp.float32) + bias   # (Bb,1,T)

    mask_f = mask_ref[...]                                     # (Bb, 1, T)
    masked = mask_f > 0.5
    neg_inf = jnp.float32(-jnp.inf)
    attn = jnp.where(masked, neg_inf, logits)

    # If ALL positions of a row are masked, fill the row with 0 before the
    # softmax (PyTorch aux_mask path -> uniform weights).
    all_masked = jnp.min(mask_f, axis=2, keepdims=True) > 0.5  # (Bb, 1, 1)
    attn = jnp.where(all_masked, jnp.float32(0.0), attn)

    # Softmax over the sequence axis (lanes). exp(-inf - finite) == 0.
    mx = jnp.max(attn, axis=2, keepdims=True)                  # (Bb, 1, 1)
    e = jnp.exp(attn - mx)                                     # (Bb, 1, T)
    s = jnp.sum(e, axis=2, keepdims=True)                      # (Bb, 1, 1)
    score = e / s                                              # (Bb, 1, T)

    # fused = score @ encoding : (Bb, 1, T) x (Bb, T, D) -> (Bb, 1, D)
    # score cast to enc.dtype (flash-style) so enc is never upcast in VMEM.
    fused = jnp.einsum("bqt,btd->bqd", score.astype(enc.dtype), enc,
                       preferred_element_type=jnp.float32)
    out_ref[...] = fused[:, 0, :].astype(out_ref.dtype)        # (Bb, D)


def _choose_batch_block(B, T, D, itemsize, target_bytes):
    """Rows per grid step: ~target_bytes per enc buffer, multiple of 8,
    and >= 2 grid steps whenever B > 8 (v7x has 2 TensorCores)."""
    if B <= 8:
        return B
    row_bytes = max(1, T * D * itemsize)
    rows = max(1, target_bytes // row_bytes)
    Bb = max(8, (min(rows, B) // 8) * 8)
    if Bb >= B:  # keep at least 2 (roughly balanced) grid steps
        Bb = max(8, (((B + 1) // 2) // 8) * 8)
    return Bb


def sla_forward(encoding, weight, bias, mask=None, *, target_block_bytes=4 << 20):
    """encoding: (B, T, D) any float dtype; weight: (1, D) or (D,);
    bias: scalar-ish; mask: optional (B, T) bool (True = masked).
    Returns (B, D) float32."""
    B, T, D = encoding.shape
    itemsize = jnp.dtype(encoding.dtype).itemsize

    # Lane-dense mask layout (B, 1, T), float32 (1.0 = masked).
    if mask is None:
        mask_f = jnp.zeros((B, 1, T), jnp.float32)
    else:
        mask_f = mask.reshape(B, T).astype(jnp.float32)[:, None, :]

    w2 = jnp.asarray(weight, jnp.float32).reshape(1, D)
    b1 = jnp.asarray(bias, jnp.float32).reshape(1)

    Bb = _choose_batch_block(B, T, D, itemsize, target_block_bytes)
    grid = (pl.cdiv(B, Bb),)  # ragged tail handled by partial edge block

    enc_block_bytes = Bb * T * D * itemsize
    # Cover 2x double-buffered enc blocks + intermediates with headroom;
    # 32 MiB floor (raises v5e's 16 MiB default), 64 MiB ceiling (v7x physical).
    vmem_limit = int(max(32 << 20, min(64 << 20,
                                       int(2.5 * enc_block_bytes) + (6 << 20))))

    cost = pl.CostEstimate(
        flops=4 * B * T * D,                 # two (B,T,D) contractions
        transcendentals=B * T,               # exp in softmax
        bytes_accessed=(B * T * D * itemsize # encoding read
                        + B * T * 4          # mask read
                        + B * D * 4          # output write
                        + D * 4),            # weight
    )

    out = pl.pallas_call(
        sla_kernel,
        out_shape=jax.ShapeDtypeStruct((B, D), jnp.float32),
        grid=grid,
        in_specs=[
            pl.BlockSpec((Bb, T, D), lambda i: (i, 0, 0)),     # encoding (native dtype)
            pl.BlockSpec((Bb, 1, T), lambda i: (i, 0, 0)),     # mask, lane-dense
            pl.BlockSpec((1, D), lambda i: (0, 0)),            # weight (shared, constant block)
            pl.BlockSpec(memory_space=pltpu.MemorySpace.SMEM), # bias scalar
        ],
        out_specs=pl.BlockSpec((Bb, D), lambda i: (i, 0)),
        compiler_params=pltpu.CompilerParams(
            dimension_semantics=("parallel",),
            vmem_limit_bytes=vmem_limit),
        cost_estimate=cost,
    )(encoding, mask_f, w2, b1)
    return out


def sla_reference(encoding, weight, bias, mask=None):
    """Plain-JAX reference mirroring the PyTorch forward (fp32 throughout)."""
    enc = encoding.astype(jnp.float32)
    attn = jnp.einsum("btd,d->bt", enc, jnp.asarray(weight, jnp.float32).reshape(-1))
    attn = attn + jnp.asarray(bias, jnp.float32).reshape(())
    attn = attn[..., None]                                          # (B, T, 1)
    if mask is not None:
        attn = jnp.where(mask[..., None], -jnp.inf, attn)
        aux = jnp.all(attn == -jnp.inf, axis=1, keepdims=True)
        attn = jnp.where(aux, 0.0, attn)
    score = jax.nn.softmax(attn, axis=1)                            # (B, T, 1)
    score = jnp.swapaxes(score, -2, -1)                             # (B, 1, T)
    return jnp.matmul(score, enc)[:, 0, :]                          # (B, D)


if __name__ == "__main__":
    B, T, D = 2, 8, 32  # batch, sequence length, d_enc

    key = jax.random.PRNGKey(0)
    k_enc, k_w, k_b, k_enc2 = jax.random.split(key, 4)

    encoding = jax.random.normal(k_enc, (B, T, D), dtype=jnp.float32)
    # Linear(d_enc, 1) parameters (PyTorch-style uniform init bounds).
    bound = 1.0 / (D ** 0.5)
    weight = jax.random.uniform(k_w, (1, D), jnp.float32, -bound, bound)
    bias = jax.random.uniform(k_b, (1,), jnp.float32, -bound, bound)

    # 1) Length-style mask (True = masked position).
    lengths = jnp.array([6, 4], dtype=jnp.int32)
    mask = jnp.arange(T)[None, :] >= lengths[:, None]               # (B, T)
    out = jax.block_until_ready(sla_forward(encoding, weight, bias, mask))
    ref = sla_reference(encoding, weight, bias, mask)
    assert out.shape == (B, D)
    assert jnp.allclose(out, ref, atol=1e-5, rtol=1e-5)

    # 2) mask=None path.
    out_nm = jax.block_until_ready(sla_forward(encoding, weight, bias, None))
    ref_nm = sla_reference(encoding, weight, bias, None)
    assert jnp.allclose(out_nm, ref_nm, atol=1e-5, rtol=1e-5)

    # 3) One fully-masked row (exercises the aux_mask -> uniform-softmax path).
    lengths2 = jnp.array([6, 0], dtype=jnp.int32)
    mask2 = jnp.arange(T)[None, :] >= lengths2[:, None]
    out_fm = jax.block_until_ready(sla_forward(encoding, weight, bias, mask2))
    ref_fm = sla_reference(encoding, weight, bias, mask2)
    assert jnp.allclose(out_fm, ref_fm, atol=1e-5, rtol=1e-5)

    # 4) Ragged batch (B not a multiple of Bb): no wrapper pad, cdiv grid,
    #    partial last block with dropped OOB writes.
    B2, T2 = 10, 16
    enc_r = jax.random.normal(k_enc2, (B2, T2, D), dtype=jnp.float32)
    len_r = jnp.array([16, 3, 7, 16, 1, 9, 12, 5, 16, 2], dtype=jnp.int32)
    mask_r = jnp.arange(T2)[None, :] >= len_r[:, None]
    out_r = jax.block_until_ready(sla_forward(enc_r, weight, bias, mask_r))
    ref_r = sla_reference(enc_r, weight, bias, mask_r)
    assert out_r.shape == (B2, D)
    assert jnp.allclose(out_r, ref_r, atol=1e-5, rtol=1e-5)

    # 5) bf16 encoding path (no fp32 upcast in VMEM); fp32 reference, loose tol.
    enc_bf16 = encoding.astype(jnp.bfloat16)
    out_bf = jax.block_until_ready(sla_forward(enc_bf16, weight, bias, mask))
    ref_bf = sla_reference(enc_bf16, weight, bias, mask)
    assert jnp.allclose(out_bf, ref_bf, atol=5e-2, rtol=5e-2)

    print("KERNEL_OK")
</pallas_src>

<mosaic_0001>
module attributes {stable_mosaic.version = 11 : i64} {
  func.func @sla_kernel(%arg0: i32, %arg1: memref<2x8x32xf32, #tpu.memory_space<vmem>>, %arg2: memref<2x1x8xf32, #tpu.memory_space<vmem>>, %arg3: memref<1x32xf32, #tpu.memory_space<vmem>>, %arg4: memref<1xf32, #tpu.memory_space<smem>>, %arg5: memref<2x32xf32, #tpu.memory_space<vmem>>) attributes {dimension_semantics = [#tpu.dimension_semantics<parallel>], iteration_bounds = array<i64: 1>, scalar_prefetch = 0 : i64, scratch_operands = 0 : i64, tpu.core_type = #tpu.core_type<tc>, window_params = [{transform_indices = @transform_0, window_bounds = array<i64: 2, 8, 32>}, {transform_indices = @transform_1, window_bounds = array<i64: 2, 1, 8>}, {pipeline_mode = #tpu.pipeline_mode<synchronous>, transform_indices = @transform_2, window_bounds = array<i64: 1, 32>}, {transform_indices = @transform_3, window_bounds = array<i64: 1>}, {transform_indices = @transform_4, window_bounds = array<i64: 2, 32>}]} {
    %c0 = arith.constant 0 : index
    %c0_0 = arith.constant 0 : index
    %c0_1 = arith.constant 0 : index
    %0 = vector.load %arg1[%c0, %c0_0, %c0_1] : memref<2x8x32xf32, #tpu.memory_space<vmem>>, vector<2x8x32xf32>
    %c0_2 = arith.constant 0 : index
    %c0_3 = arith.constant 0 : index
    %1 = vector.load %arg3[%c0_2, %c0_3] : memref<1x32xf32, #tpu.memory_space<vmem>>, vector<1x32xf32>
    %c0_4 = arith.constant 0 : index
    %2 = memref.load %arg4[%c0_4] : memref<1xf32, #tpu.memory_space<smem>>
    %3 = vector.shape_cast %1 : vector<1x32xf32> to vector<1x1x32xf32>
    %4 = vector.shape_cast %3 : vector<1x1x32xf32> to vector<1x1x32xf32>
    %5 = vector.broadcast %4 : vector<1x1x32xf32> to vector<2x1x32xf32>
    "tpu.trace_start"() <{level = 10 : i32, message = "bqd,btd->bqt"}> : () -> ()
    %cst = arith.constant dense<0.000000e+00> : vector<2x1x8xf32>
    %6 = tpu.matmul %5, %0, %cst {dimension_numbers = #tpu.dot_dimension_numbers<[2], [2], [1], [1], [0, 0, 0, 1, 1, 1], [0], [0]>} : vector<2x1x32xf32>, vector<2x8x32xf32>, vector<2x1x8xf32> -> vector<2x1x8xf32>
    "tpu.trace_stop"() : () -> ()
    %7 = vector.broadcast %2 : f32 to vector<2x1x8xf32>
    %8 = arith.addf %6, %7 : vector<2x1x8xf32>
    %c0_5 = arith.constant 0 : index
    %c0_6 = arith.constant 0 : index
    %c0_7 = arith.constant 0 : index
    %9 = vector.load %arg2[%c0_5, %c0_6, %c0_7] : memref<2x1x8xf32, #tpu.memory_space<vmem>>, vector<2x1x8xf32>
    %cst_8 = arith.constant 5.000000e-01 : f32
    %10 = vector.broadcast %cst_8 : f32 to vector<2x1x8xf32>
    %11 = arith.cmpf ogt, %9, %10 : vector<2x1x8xf32>
    %cst_9 = arith.constant 0xFF800000 : f32
    %12 = vector.broadcast %cst_9 : f32 to vector<2x1x8xf32>
    %13 = arith.select %11, %12, %8 : vector<2x1x8xi1>, vector<2x1x8xf32>
    %cst_10 = arith.constant dense<0x7F800000> : vector<2x1xf32>
    %14 = vector.multi_reduction <minimumf>, %9, %cst_10 [2] : vector<2x1x8xf32> to vector<2x1xf32>
    %15 = vector.shape_cast %14 : vector<2x1xf32> to vector<2x1x1xf32>
    %cst_11 = arith.constant 5.000000e-01 : f32
    %16 = vector.broadcast %cst_11 : f32 to vector<2x1x1xf32>
    %17 = arith.cmpf ogt, %15, %16 : vector<2x1x1xf32>
    %cst_12 = arith.constant 0.000000e+00 : f32
    %18 = vector.shape_cast %17 : vector<2x1x1xi1> to vector<2x1x1xi1>
    %19 = vector.broadcast %18 : vector<2x1x1xi1> to vector<2x1x8xi1>
    %20 = vector.broadcast %cst_12 : f32 to vector<2x1x8xf32>
    %21 = arith.select %19, %20, %13 : vector<2x1x8xi1>, vector<2x1x8xf32>
    %cst_13 = arith.constant dense<0xFF800000> : vector<2x1xf32>
    %22 = vector.multi_reduction <maximumf>, %21, %cst_13 [2] : vector<2x1x8xf32> to vector<2x1xf32>
    %23 = vector.shape_cast %22 : vector<2x1xf32> to vector<2x1x1xf32>
    %24 = vector.broadcast %23 : vector<2x1x1xf32> to vector<2x1x8xf32>
    %25 = arith.subf %21, %24 : vector<2x1x8xf32>
    %26 = math.exp %25 : vector<2x1x8xf32>
    %cst_14 = arith.constant dense<0.000000e+00> : vector<2x1xf32>
    %27 = vector.multi_reduction <add>, %26, %cst_14 [2] : vector<2x1x8xf32> to vector<2x1xf32>
    %28 = vector.shape_cast %27 : vector<2x1xf32> to vector<2x1x1xf32>
    %29 = vector.broadcast %28 : vector<2x1x1xf32> to vector<2x1x8xf32>
    %30 = arith.divf %26, %29 : vector<2x1x8xf32>
    "tpu.trace_start"() <{level = 10 : i32, message = "bqt,btd->bqd"}> : () -> ()
    %cst_15 = arith.constant dense<0.000000e+00> : vector<2x1x32xf32>
    %31 = tpu.matmul %30, %0, %cst_15 {dimension_numbers = #tpu.dot_dimension_numbers<[2], [1], [1], [2], [0, 0, 0, 1, 1, 2], [0], [0]>} : vector<2x1x8xf32>, vector<2x8x32xf32>, vector<2x1x32xf32> -> vector<2x1x32xf32>
    "tpu.trace_stop"() : () -> ()
    %32 = vector.shape_cast %31 : vector<2x1x32xf32> to vector<2x32xf32>
    %c0_16 = arith.constant 0 : index
    %c0_17 = arith.constant 0 : index
    %33 = vector.load %arg5[%c0_16, %c0_17] : memref<2x32xf32, #tpu.memory_space<vmem>>, vector<2x32xf32>
    tpu.vector_store %arg5[%c0_16, %c0_17], %32 {strides = array<i32>} : memref<2x32xf32, #tpu.memory_space<vmem>>, vector<2x32xf32>,
    return
  }
  func.func @transform_0(%arg0: i32) -> (i32, i32, i32) {
    %c0_i32 = arith.constant 0 : i32
    %c0_i32_0 = arith.constant 0 : i32
    %c0_i32_1 = arith.constant 0 : i32
    return %arg0, %c0_i32, %c0_i32_0 : i32, i32, i32
  }
  func.func @transform_1(%arg0: i32) -> (i32, i32, i32) {
    %c0_i32 = arith.constant 0 : i32
    %c0_i32_0 = arith.constant 0 : i32
    %c0_i32_1 = arith.constant 0 : i32
    return %arg0, %c0_i32, %c0_i32_0 : i32, i32, i32
  }
  func.func @transform_2(%arg0: i32) -> (i32, i32) {
    %c0_i32 = arith.constant 0 : i32
    %c0_i32_0 = arith.constant 0 : i32
    %c0_i32_1 = arith.constant 0 : i32
    return %c0_i32, %c0_i32_0 : i32, i32
  }
  func.func @transform_3(%arg0: i32) -> i32 {
    %c0_i32 = arith.constant 0 : i32
    %c0_i32_0 = arith.constant 0 : i32
    return %c0_i32 : i32
  }
  func.func @transform_4(%arg0: i32) -> (i32, i32) {
    %c0_i32 = arith.constant 0 : i32
    %c0_i32_0 = arith.constant 0 : i32
    return %arg0, %c0_i32 : i32, i32
  }
}

</mosaic_0001>

<llo_original>
// kernel: tpu_custom_call.1
$region0: #{tpu_custom_call.1}
  #allocation0 [shape = 'u32[]', space=smem, size = 0x4, offset = 0x4, fixed_abs, tag = 'smem constant byte address 0x4 - core index']
  #allocation1 [shape = 'u32[144,128]{1,0:T(1,128)}', space=vmem, size = 0x12000, scoped, tag = 'internal scratch']
  #allocation2 [shape = 'f32[1]{0:T(128)S(6)}', space=smem, size = 0x200, scoped, tag = 'scoped memory for tpu_custom_call.1']
  %s0 = inlined_call_operand.hbm [shape: f32[2,8,32], index: 0, kind: input, shape index: {}]
  %s1 = inlined_call_operand.vmem [shape: f32[2,1,8], index: 1, kind: input, shape index: {}]
  %s2 = inlined_call_operand.vmem [shape: f32[1,32], index: 2, kind: input, shape index: {}]
  %s3 = inlined_call_operand.<no memory space> [shape: f32[1], index: 3, kind: input, shape index: {}]
  %s4 = inlined_call_operand.hbm [shape: f32[2,32], index: 4, kind: output, shape index: {}]
  %s5 = sld [smem:[#allocation0]]
  $region30: #{tpu_custom_call.1} parent=0
    _
  %s7 = ssub.s32 1, %s5
  %s8 = scalar_select 0, %s7, %s5
  %9 = sst [smem:[#allocation2]] %s3
  $region1: #{tpu_custom_call.1} parent=0
    #allocation3 [shape = 'u8[8192]{0}', space=vmem, size = 0x2000, scoped, tag = 'input window, operand 0, single buffered']
    #allocation4 [shape = 's32[1]{0}', space=sflag, size = 0x4, scoped, tag = 'scoped memory for tpu_custom_call.1']
    #allocation5 [shape = 's32[1]{0}', space=sflag, size = 0x4, scoped, tag = 'scoped memory for tpu_custom_call.1']
    #allocation6 [shape = 'u8[1024]{0}', space=vmem, size = 0x400, scoped, tag = 'output window, operand 0, single buffered']
    %10 = vsyncpa [#allocation4], 0
    %11 = vsyncpa [#allocation5], 0
    // Predicated region
    $region2: #{tpu_custom_call.1} parent=1 // pred_check
      _
    $region3: #{tpu_custom_call.1} parent=1 // pred_check_branch
      %13 = sbr.rel (0) target = $region5
    $region4: #{tpu_custom_call.1} parent=1 // pred_region
      %s15 = ssub.s32 256, 256
      %16 = vsyncadd [#allocation4], %s15
      %s17 = sshll.u32 [#allocation3], 4
      %s18 = int_to_ptr.vmem [resolvable:$true] %s17
      %23 = dma.hbm_to_vmem [thread:$0]  %s0, 256, %s18, [#allocation4], 128, 128, 8
    $region5: #{tpu_custom_call.1} parent=1 // pred_fallthru
      _
    // Predicated region
    $region6: #{tpu_custom_call.1} parent=1 // pred_check
      _
    $region7: #{tpu_custom_call.1} parent=1 // pred_check_branch
      %25 = sbr.rel (0) target = $region9
    $region8: #{tpu_custom_call.1} parent=1 // pred_region
      _
    $region9: #{tpu_custom_call.1} parent=1 // pred_fallthru
      _
    // Predicated region
    $region10: #{tpu_custom_call.1} parent=1 // pred_check
      _
    $region11: #{tpu_custom_call.1} parent=1 // pred_check_branch
      %27 = sbr.rel (0) target = $region13
    $region12: #{tpu_custom_call.1} parent=1 // pred_region
      _
    $region13: #{tpu_custom_call.1} parent=1 // pred_fallthru
      _
    // Predicated region
    $region14: #{tpu_custom_call.1} parent=1 // pred_check
      _
    $region15: #{tpu_custom_call.1} parent=1 // pred_check_branch
      %29 = sbr.rel (0) target = $region17
    $region16: #{tpu_custom_call.1} parent=1 // pred_region
      _
    $region17: #{tpu_custom_call.1} parent=1 // pred_fallthru
      _
    // Predicated region
    $region18: #{tpu_custom_call.1} parent=1 // pred_check
      _
    $region19: #{tpu_custom_call.1} parent=1 // pred_check_branch
      %31 = sbr.rel (0) target = $region21
    $region20: #{tpu_custom_call.1} parent=1 // pred_region
      %32 = dma.done [#allocation4], 256
    $region21: #{tpu_custom_call.1} parent=1 // pred_fallthru
      _
    %v33 = vld [vmem:[#allocation3] sm:$0xff]
    %v34 = vld [vmem:[#allocation3 + $0x8] sm:$0xff]
    %v35 = vld [vmem:[%s2] sm:$0x1]
    %s36 = sld [smem:[#allocation2]]
    %v37 = vstv %s36
    %vm38 = vcmask 261120
    %v40 = vsel %vm38, %v35, 0
    %v43 = vsel %vm38, %v33, 0
    %45 = vmatprep.subr.mxu0 0.0
    %46 = vmatpush1.xpose.msra.mxu0 0.0
    %47 = vmatprep.subr.mxu0 0.0
    %48 = vmatpush1.xpose.msra.mxu0 0.0
    %49 = vmatprep.subr.mxu0 0.0
    %50 = vmatpush1.xpose.msra.mxu0 0.0
    %51 = vmatprep.subr.mxu0 0.0
    %52 = vmatpush1.xpose.msra.mxu0 0.0
    %53 = vmatprep.subr.mxu0 0.0
    %54 = vmatpush1.xpose.msra.mxu0 0.0
    %55 = vmatprep.subr.mxu0 0.0
    %56 = vmatpush1.xpose.msra.mxu0 0.0
    %57 = vmatprep.subr.mxu0 0.0
    %58 = vmatpush1.xpose.msra.mxu0 0.0
    %59 = vmatprep.subr.mxu0 0.0
    %60 = vmatpush1.xpose.msra.mxu0 0.0
    %61 = vmatprep.subr.mxu0 0.0
    %62 = vmatpush1.xpose.msra.mxu0 0.0
    %63 = vmatprep.subr.mxu0 0.0
    %64 = vmatpush1.xpose.msra.mxu0 0.0
    %65 = vmatprep.subr.mxu0 0.0
    %66 = vmatpush1.xpose.msra.mxu0 0.0
    %67 = vmatprep.subr.mxu0 0.0
    %68 = vmatpush1.xpose.msra.mxu0 0.0
    %69 = vmatprep.subr.mxu0 0.0
    %70 = vmatpush1.xpose.msra.mxu0 0.0
    %71 = vmatprep.subr.mxu0 0.0
    %72 = vmatpush1.xpose.msra.mxu0 0.0
    %73 = vmatprep.subr.mxu0 0.0
    %74 = vmatpush1.xpose.msra.mxu0 0.0
    %75 = vmatprep.subr.mxu0 0.0
    %76 = vmatpush1.xpose.msra.mxu0 %v43
    %77 = vmatprep.subr.mxu0 0.0
    %78 = vmatpush2.xpose.msra.mxu0 0.0
    %79 = vmatprep.subr.mxu0 0.0
    %80 = vmatpush2.xpose.msra.mxu0 0.0
    %81 = vmatprep.subr.mxu0 0.0
    %82 = vmatpush2.xpose.msra.mxu0 0.0
    %83 = vmatprep.subr.mxu0 0.0
    %84 = vmatpush2.xpose.msra.mxu0 0.0
    %85 = vmatprep.subr.mxu0 0.0
    %86 = vmatpush2.xpose.msra.mxu0 0.0
    %87 = vmatprep.subr.mxu0 0.0
    %88 = vmatpush2.xpose.msra.mxu0 0.0
    %89 = vmatprep.subr.mxu0 0.0
    %90 = vmatpush2.xpose.msra.mxu0 0.0
    %91 = vmatprep.subr.mxu0 0.0
    %92 = vmatpush2.xpose.msra.mxu0 0.0
    %93 = vmatprep.subr.mxu0 0.0
    %94 = vmatpush2.xpose.msra.mxu0 0.0
    %95 = vmatprep.subr.mxu0 0.0
    %96 = vmatpush2.xpose.msra.mxu0 0.0
    %97 = vmatprep.subr.mxu0 0.0
    %98 = vmatpush2.xpose.msra.mxu0 0.0
    %99 = vmatprep.subr.mxu0 0.0
    %100 = vmatpush2.xpose.msra.mxu0 0.0
    %101 = vmatprep.subr.mxu0 0.0
    %102 = vmatpush2.xpose.msra.mxu0 0.0
    %103 = vmatprep.subr.mxu0 0.0
    %104 = vmatpush2.xpose.msra.mxu0 0.0
    %105 = vmatprep.subr.mxu0 0.0
    %106 = vmatpush2.xpose.msra.mxu0 0.0
    %107 = vmatprep.subr.mxu0 0.0
    %108 = vmatpush2.xpose.msra.mxu0 0.0
    %109 = vmatprep.mubr.f32.mxu0 0.0
    %110 = vmatmul.mubr.f32.gmra.mxu0 %v40
    %v111 = vpop.f32.mrf.mxu0
    %v112 = vadd.f32 %v37, %v111
    %v113 = vpop.f32.mrf.mxu0
    %114 = vdwg.mxu0
    %v116 = vsel %vm38, %v34, 0
    %118 = vmatprep.subr.mxu0 0.0
    %119 = vmatpush1.xpose.msra.mxu0 0.0
    %120 = vmatprep.subr.mxu0 0.0
    %121 = vmatpush1.xpose.msra.mxu0 0.0
    %122 = vmatprep.subr.mxu0 0.0
    %123 = vmatpush1.xpose.msra.mxu0 0.0
    %124 = vmatprep.subr.mxu0 0.0
    %125 = vmatpush1.xpose.msra.mxu0 0.0
    %126 = vmatprep.subr.mxu0 0.0
    %127 = vmatpush1.xpose.msra.mxu0 0.0
    %128 = vmatprep.subr.mxu0 0.0
    %129 = vmatpush1.xpose.msra.mxu0 0.0
    %130 = vmatprep.subr.mxu0 0.0
    %131 = vmatpush1.xpose.msra.mxu0 0.0
    %132 = vmatprep.subr.mxu0 0.0
    %133 = vmatpush1.xpose.msra.mxu0 0.0
    %134 = vmatprep.subr.mxu0 0.0
    %135 = vmatpush1.xpose.msra.mxu0 0.0
    %136 = vmatprep.subr.mxu0 0.0
    %137 = vmatpush1.xpose.msra.mxu0 0.0
    %138 = vmatprep.subr.mxu0 0.0
    %139 = vmatpush1.xpose.msra.mxu0 0.0
    %140 = vmatprep.subr.mxu0 0.0
    %141 = vmatpush1.xpose.msra.mxu0 0.0
    %142 = vmatprep.subr.mxu0 0.0
    %143 = vmatpush1.xpose.msra.mxu0 0.0
    %144 = vmatprep.subr.mxu0 0.0
    %145 = vmatpush1.xpose.msra.mxu0 0.0
    %146 = vmatprep.subr.mxu0 0.0
    %147 = vmatpush1.xpose.msra.mxu0 0.0
    %148 = vmatprep.subr.mxu0 0.0
    %149 = vmatpush1.xpose.msra.mxu0 %v116
    %150 = vmatprep.subr.mxu0 0.0
    %151 = vmatpush2.xpose.msra.mxu0 0.0
    %152 = vmatprep.subr.mxu0 0.0
    %153 = vmatpush2.xpose.msra.mxu0 0.0
    %154 = vmatprep.subr.mxu0 0.0
    %155 = vmatpush2.xpose.msra.mxu0 0.0
    %156 = vmatprep.subr.mxu0 0.0
    %157 = vmatpush2.xpose.msra.mxu0 0.0
    %158 = vmatprep.subr.mxu0 0.0
    %159 = vmatpush2.xpose.msra.mxu0 0.0
    %160 = vmatprep.subr.mxu0 0.0
    %161 = vmatpush2.xpose.msra.mxu0 0.0
    %162 = vmatprep.subr.mxu0 0.0
    %163 = vmatpush2.xpose.msra.mxu0 0.0
    %164 = vmatprep.subr.mxu0 0.0
    %165 = vmatpush2.xpose.msra.mxu0 0.0
    %166 = vmatprep.subr.mxu0 0.0
    %167 = vmatpush2.xpose.msra.mxu0 0.0
    %168 = vmatprep.subr.mxu0 0.0
    %169 = vmatpush2.xpose.msra.mxu0 0.0
    %170 = vmatprep.subr.mxu0 0.0
    %171 = vmatpush2.xpose.msra.mxu0 0.0
    %172 = vmatprep.subr.mxu0 0.0
    %173 = vmatpush2.xpose.msra.mxu0 0.0
    %174 = vmatprep.subr.mxu0 0.0
    %175 = vmatpush2.xpose.msra.mxu0 0.0
    %176 = vmatprep.subr.mxu0 0.0
    %177 = vmatpush2.xpose.msra.mxu0 0.0
    %178 = vmatprep.subr.mxu0 0.0
    %179 = vmatpush2.xpose.msra.mxu0 0.0
    %180 = vmatprep.subr.mxu0 0.0
    %181 = vmatpush2.xpose.msra.mxu0 0.0
    %182 = vmatprep.mubr.f32.mxu0 0.0
    %183 = vmatmul.mubr.f32.gmra.mxu0 %v40
    %v184 = vpop.f32.mrf.mxu0
    %v185 = vadd.f32 %v37, %v184
    %v186 = vpop.f32.mrf.mxu0
    %187 = vdwg.mxu0
    %v188 = vld [vmem:[%s1] sm:$0x1]
    %v189 = vld [vmem:[%s1 + $0x1] sm:$0x1]
    %vm190 = vcmp.gt.f32.partialorder %v188, 0.5
    %vm191 = vcmp.gt.f32.partialorder %v189, 0.5
    %v192 = vsel %vm190, -inf, %v112
    %v193 = vsel %vm191, -inf, %v185
    %vm194 = vcmask 57344
    %v195 = vsel %vm194, %v188, inf
    %196 = vmin.xlane.f32.xlu0 %v195
    %v197 = vpop.xlane.xlu0 %196
    %v198 = vsel %vm194, %v189, inf
    %199 = vmin.xlane.f32.xlu0 %v198
    %v200 = vpop.xlane.xlu0 %199
    %vm201 = vcmp.gt.f32.partialorder %v197, 0.5
    %vm202 = vcmp.gt.f32.partialorder %v200, 0.5
    %v203 = vsel %vm201, 1, 0
    %v204 = vsel %vm202, 1, 0
    %vm205 = vcmp.eq.s32.totalorder %v203, 1
    %vm206 = vcmp.eq.s32.totalorder %v204, 1
    %v207 = vsel %vm205, 0.0, %v192
    %v208 = vsel %vm206, 0.0, %v193
    %v209 = vsel %vm194, %v207, -inf
    %210 = vmax.xlane.f32.xlu0 %v209
    %v211 = vpop.xlane.xlu0 %210
    %v212 = vsel %vm194, %v208, -inf
    %213 = vmax.xlane.f32.xlu0 %v212
    %v214 = vpop.xlane.xlu0 %213
    %v215 = vsub.f32 %v207, %v211
    %v216 = vsub.f32 %v208, %v214
    %v217 = vmul.f32 %v215, 1.442695
    %v218 = vpow.pop %v217
    %v219 = vmul.f32 %v216, 1.442695
    %v220 = vpow.pop %v219
    %v221 = vsel %vm194, %v218, 0.0
    %222 = vadd.xlane.f32.xlu0 %v221
    %v223 = vpop.xlane.xlu0 %222
    %v224 = vsel %vm194, %v220, 0.0
    %225 = vadd.xlane.f32.xlu0 %v224
    %v226 = vpop.xlane.xlu0 %225
    %v227 = vrcp.pop %v223
    %v228 = vmul.f32 %v218, %v227
    %v229 = vrcp.pop %v226
    %v230 = vmul.f32 %v220, %v229
    %vm231 = vcmask 64512
    %v233 = vsel %vm231, %v228, 0
    %235 = vmatprep.subr.mxu0 0.0
    %236 = vmatpush1.msra.mxu0 0.0
    %237 = vmatprep.subr.mxu0 0.0
    %238 = vmatpush1.msra.mxu0 0.0
    %239 = vmatprep.subr.mxu0 0.0
    %240 = vmatpush1.msra.mxu0 0.0
    %241 = vmatprep.subr.mxu0 0.0
    %242 = vmatpush1.msra.mxu0 0.0
    %243 = vmatprep.subr.mxu0 0.0
    %244 = vmatpush1.msra.mxu0 0.0
    %245 = vmatprep.subr.mxu0 0.0
    %246 = vmatpush1.msra.mxu0 0.0
    %247 = vmatprep.subr.mxu0 0.0
    %248 = vmatpush1.msra.mxu0 0.0
    %249 = vmatprep.subr.mxu0 0.0
    %250 = vmatpush1.msra.mxu0 0.0
    %251 = vmatprep.subr.mxu0 0.0
    %252 = vmatpush1.msra.mxu0 0.0
    %253 = vmatprep.subr.mxu0 0.0
    %254 = vmatpush1.msra.mxu0 0.0
    %255 = vmatprep.subr.mxu0 0.0
    %256 = vmatpush1.msra.mxu0 0.0
    %257 = vmatprep.subr.mxu0 0.0
    %258 = vmatpush1.msra.mxu0 0.0
    %259 = vmatprep.subr.mxu0 0.0
    %260 = vmatpush1.msra.mxu0 0.0
    %261 = vmatprep.subr.mxu0 0.0
    %262 = vmatpush1.msra.mxu0 0.0
    %263 = vmatprep.subr.mxu0 0.0
    %264 = vmatpush1.msra.mxu0 0.0
    %265 = vmatprep.subr.mxu0 0.0
    %266 = vmatpush1.msra.mxu0 %v33
    %267 = vmatprep.subr.mxu0 0.0
    %268 = vmatpush2.msra.mxu0 0.0
    %269 = vmatprep.subr.mxu0 0.0
    %270 = vmatpush2.msra.mxu0 0.0
    %271 = vmatprep.subr.mxu0 0.0
    %272 = vmatpush2.msra.mxu0 0.0
    %273 = vmatprep.subr.mxu0 0.0
    %274 = vmatpush2.msra.mxu0 0.0
    %275 = vmatprep.subr.mxu0 0.0
    %276 = vmatpush2.msra.mxu0 0.0
    %277 = vmatprep.subr.mxu0 0.0
    %278 = vmatpush2.msra.mxu0 0.0
    %279 = vmatprep.subr.mxu0 0.0
    %280 = vmatpush2.msra.mxu0 0.0
    %281 = vmatprep.subr.mxu0 0.0
    %282 = vmatpush2.msra.mxu0 0.0
    %283 = vmatprep.subr.mxu0 0.0
    %284 = vmatpush2.msra.mxu0 0.0
    %285 = vmatprep.subr.mxu0 0.0
    %286 = vmatpush2.msra.mxu0 0.0
    %287 = vmatprep.subr.mxu0 0.0
    %288 = vmatpush2.msra.mxu0 0.0
    %289 = vmatprep.subr.mxu0 0.0
    %290 = vmatpush2.msra.mxu0 0.0
    %291 = vmatprep.subr.mxu0 0.0
    %292 = vmatpush2.msra.mxu0 0.0
    %293 = vmatprep.subr.mxu0 0.0
    %294 = vmatpush2.msra.mxu0 0.0
    %295 = vmatprep.subr.mxu0 0.0
    %296 = vmatpush2.msra.mxu0 0.0
    %297 = vmatprep.subr.mxu0 0.0
    %298 = vmatpush2.msra.mxu0 0.0
    %299 = vmatprep.mubr.f32.mxu0 0.0
    %300 = vmatmul.mubr.f32.gmra.mxu0 %v233
    %v301 = vpop.f32.mrf.mxu0
    %v302 = vadd.f32 0.0, %v301
    %v303 = vpop.f32.mrf.mxu0
    %304 = vdwg.mxu0
    %v306 = vsel %vm231, %v230, 0
    %308 = vmatprep.subr.mxu0 0.0
    %309 = vmatpush1.msra.mxu0 0.0
    %310 = vmatprep.subr.mxu0 0.0
    %311 = vmatpush1.msra.mxu0 0.0
    %312 = vmatprep.subr.mxu0 0.0
    %313 = vmatpush1.msra.mxu0 0.0
    %314 = vmatprep.subr.mxu0 0.0
    %315 = vmatpush1.msra.mxu0 0.0
    %316 = vmatprep.subr.mxu0 0.0
    %317 = vmatpush1.msra.mxu0 0.0
    %318 = vmatprep.subr.mxu0 0.0
    %319 = vmatpush1.msra.mxu0 0.0
    %320 = vmatprep.subr.mxu0 0.0
    %321 = vmatpush1.msra.mxu0 0.0
    %322 = vmatprep.subr.mxu0 0.0
    %323 = vmatpush1.msra.mxu0 0.0
    %324 = vmatprep.subr.mxu0 0.0
    %325 = vmatpush1.msra.mxu0 0.0
    %326 = vmatprep.subr.mxu0 0.0
    %327 = vmatpush1.msra.mxu0 0.0
    %328 = vmatprep.subr.mxu0 0.0
    %329 = vmatpush1.msra.mxu0 0.0
    %330 = vmatprep.subr.mxu0 0.0
    %331 = vmatpush1.msra.mxu0 0.0
    %332 = vmatprep.subr.mxu0 0.0
    %333 = vmatpush1.msra.mxu0 0.0
    %334 = vmatprep.subr.mxu0 0.0
    %335 = vmatpush1.msra.mxu0 0.0
    %336 = vmatprep.subr.mxu0 0.0
    %337 = vmatpush1.msra.mxu0 0.0
    %338 = vmatprep.subr.mxu0 0.0
    %339 = vmatpush1.msra.mxu0 %v34
    %340 = vmatprep.subr.mxu0 0.0
    %341 = vmatpush2.msra.mxu0 0.0
    %342 = vmatprep.subr.mxu0 0.0
    %343 = vmatpush2.msra.mxu0 0.0
    %344 = vmatprep.subr.mxu0 0.0
    %345 = vmatpush2.msra.mxu0 0.0
    %346 = vmatprep.subr.mxu0 0.0
    %347 = vmatpush2.msra.mxu0 0.0
    %348 = vmatprep.subr.mxu0 0.0
    %349 = vmatpush2.msra.mxu0 0.0
    %350 = vmatprep.subr.mxu0 0.0
    %351 = vmatpush2.msra.mxu0 0.0
    %352 = vmatprep.subr.mxu0 0.0
    %353 = vmatpush2.msra.mxu0 0.0
    %354 = vmatprep.subr.mxu0 0.0
    %355 = vmatpush2.msra.mxu0 0.0
    %356 = vmatprep.subr.mxu0 0.0
    %357 = vmatpush2.msra.mxu0 0.0
    %358 = vmatprep.subr.mxu0 0.0
    %359 = vmatpush2.msra.mxu0 0.0
    %360 = vmatprep.subr.mxu0 0.0
    %361 = vmatpush2.msra.mxu0 0.0
    %362 = vmatprep.subr.mxu0 0.0
    %363 = vmatpush2.msra.mxu0 0.0
    %364 = vmatprep.subr.mxu0 0.0
    %365 = vmatpush2.msra.mxu0 0.0
    %366 = vmatprep.subr.mxu0 0.0
    %367 = vmatpush2.msra.mxu0 0.0
    %368 = vmatprep.subr.mxu0 0.0
    %369 = vmatpush2.msra.mxu0 0.0
    %370 = vmatprep.subr.mxu0 0.0
    %371 = vmatpush2.msra.mxu0 0.0
    %372 = vmatprep.mubr.f32.mxu0 0.0
    %373 = vmatmul.mubr.f32.gmra.mxu0 %v306
    %v374 = vpop.f32.mrf.mxu0
    %v375 = vadd.f32 0.0, %v374
    %v376 = vpop.f32.mrf.mxu0
    %377 = vdwg.mxu0
    %v380 = vrot.slane %v375, 7
    %vm381 = vcmask 1041409
    %v382 = vsel %vm381, %v380, %v302
    %vm384 = vcmask 254976
    %385 = vst.msk [vmem:[#allocation6] sm:$0x3] %vm384, %v382
    // Predicated region
    $region22: #{tpu_custom_call.1} parent=1 // pred_check
      _
    $region23: #{tpu_custom_call.1} parent=1 // pred_check_branch
      %387 = sbr.rel (0) target = $region25
    $region24: #{tpu_custom_call.1} parent=1 // pred_region
      %s389 = ssub.s32 32, 32
      %390 = vsyncadd [#allocation5], %s389
      %s392 = sshll.u32 [#allocation6], 4
      %s393 = int_to_ptr.vmem [resolvable:$true] %s392
      %395 = dma.vmem_to_hbm [thread:$0]  %s393, 32, %s4, [#allocation5]
    $region25: #{tpu_custom_call.1} parent=1 // pred_fallthru
      _
    // Predicated region
    $region26: #{tpu_custom_call.1} parent=1 // pred_check
      _
    $region27: #{tpu_custom_call.1} parent=1 // pred_check_branch
      %397 = sbr.rel (0) target = $region29
    $region28: #{tpu_custom_call.1} parent=1 // pred_region
      %398 = dma.done [#allocation5], 32
    $region29: #{tpu_custom_call.1} parent=1 // pred_fallthru
      _
    %399 = vsyncpa [#allocation4], 1
    %400 = vsyncpa [#allocation5], 1

</llo_original>
